<compile_context>
chip_gen: v7x
topology: tpu7x:2x2x1
jax: 0.10.0
libtpu: 0.0.40
codegen_flags: <defaults>
</compile_context>

<pallas_src>
import functools

import jax
import jax.numpy as jnp
from jax import lax
from jax.experimental import pallas as pl
from jax.experimental.pallas import tpu as pltpu

_NEG = -1e30          # fill for padded vocab lanes (never wins max, exp -> 0)
_LANE = 128           # TPU lane width
_MAX_TILE_N = 512     # rows per grid step: mem-bound sweet spot on v5e/v6e/v7x


def _round_up(x, m):
    return (x + m - 1) // m * m


def _onehot_gather(idx_col, table, tile_n, v_pad):
    """Gather table rows for a whole tile via a one-hot f32 MXU matmul.

    idx_col: (tile_n, 1) int32.  table: (v_pad, v_pad) f32, padded lanes -1e30.
    Exact in f32: each one-hot row selects exactly one table row, and HIGHEST
    precision makes the pass-emulated f32 matmul reconstruct the row exactly.
    Returns (logits, lane_iota) so callers can reuse the lane ids.
    """
    lane = lax.broadcasted_iota(jnp.int32, (tile_n, v_pad), 1)
    onehot = jnp.where(lane == idx_col, jnp.float32(1.0), jnp.float32(0.0))
    logits = jnp.dot(onehot, table,
                     preferred_element_type=jnp.float32,
                     precision=lax.Precision.HIGHEST)
    return logits, lane


def _bigram_logits_kernel(idx_ref, table_ref, logits_ref, *, tile_n, v_pad):
    logits, _ = _onehot_gather(idx_ref[...], table_ref[...], tile_n, v_pad)
    logits_ref[...] = logits                      # one lane-dense block store


def _bigram_loss_kernel(idx_ref, tgt_ref, table_ref, logits_ref, loss_ref, *,
                        tile_n, v_pad, n_valid, mask_rows):
    logits, lane = _onehot_gather(idx_ref[...], table_ref[...], tile_n, v_pad)
    logits_ref[...] = logits                      # one lane-dense block store

    # Target logit per row, from the block that is already live in vregs:
    # single lane select + one cross-lane reduce for the whole tile.
    tgt_col = tgt_ref[...]                                        # (tile_n, 1)
    tgt_val = jnp.sum(jnp.where(lane == tgt_col, logits, 0.0),
                      axis=-1, keepdims=True)                     # (tile_n, 1)

    # Row-wise numerically stable logsumexp (padded -1e30 lanes underflow to 0).
    m = jnp.max(logits, axis=-1, keepdims=True)
    lse = m + jnp.log(jnp.sum(jnp.exp(logits - m), axis=-1, keepdims=True))

    per_row = lse - tgt_val
    if mask_rows:
        base = pl.program_id(0) * tile_n
        row_id = base + lax.broadcasted_iota(jnp.int32, (tile_n, 1), 0)
        per_row = jnp.where(row_id < n_valid, per_row, 0.0)

    loss_ref[0, 0] = jnp.sum(per_row)             # partial (un-normalized) sum


def bigram_forward(table, idx, targets=None, *, max_tile_n=_MAX_TILE_N):
    """JAX/Pallas equivalent of BigramLanguageModel.forward.

    Args:
      table:   (V, V) float32 embedding table (nn.Embedding weight).
      idx:     (B, T) int token indices.
      targets: (B, T) int or None.
    Returns:
      (logits, loss).  Matching the PyTorch module: logits is (B, T, V) when
      targets is None and (B*T, V) when targets are given; loss is a float32
      scalar (mean cross-entropy) or None.
    """
    table = jnp.asarray(table, jnp.float32)
    V = table.shape[0]
    B, T = idx.shape
    N = B * T

    v_pad = _round_up(V, _LANE)
    tile_n = min(_round_up(max_tile_n, 8), _round_up(N, 8))
    n_pad = _round_up(N, tile_n)
    n_tiles = n_pad // tile_n
    mask_rows = n_pad != N

    # Pad vocab (lane) axis with a large negative, rows (sublane) axis to 128
    # so the one-hot contraction dim matches.  2-D layout -> full-width loads.
    table_p = jnp.full((v_pad, v_pad), _NEG, jnp.float32).at[:V, :V].set(table)

    def pad_ids(a):
        a = a.reshape(-1).astype(jnp.int32)
        if n_pad != N:
            a = jnp.pad(a, (0, n_pad - N))
        return a.reshape(n_pad, 1)

    idx_col = pad_ids(idx)

    table_spec = pl.BlockSpec((v_pad, v_pad), lambda t: (0, 0))
    ids_spec = pl.BlockSpec((tile_n, 1), lambda t: (t, 0))
    logits_spec = pl.BlockSpec((tile_n, v_pad), lambda t: (t, 0))
    cparams = pltpu.CompilerParams(dimension_semantics=("parallel",))

    if targets is None:
        logits_pad = pl.pallas_call(
            functools.partial(_bigram_logits_kernel,
                              tile_n=tile_n, v_pad=v_pad),
            grid=(n_tiles,),
            in_specs=[ids_spec, table_spec],
            out_specs=logits_spec,
            out_shape=jax.ShapeDtypeStruct((n_pad, v_pad), jnp.float32),
            compiler_params=cparams,
        )(idx_col, table_p)
        # Only the lane slice (65 of 128) remains; row padding is minimized by
        # adapting tile_n to N.  Downstream softmax/argmax could consume the
        # padded lanes directly (-1e30) to skip even this slice.
        logits = logits_pad[:N, :V].reshape(B, T, V)
        return logits, None

    tgt_col = pad_ids(targets)

    logits_pad, loss_parts = pl.pallas_call(
        functools.partial(_bigram_loss_kernel, tile_n=tile_n, v_pad=v_pad,
                          n_valid=N, mask_rows=mask_rows),
        grid=(n_tiles,),
        in_specs=[ids_spec, ids_spec, table_spec],
        out_specs=(logits_spec,
                   pl.BlockSpec((1, 1), lambda t: (t, 0),
                                memory_space=pltpu.SMEM)),
        out_shape=(jax.ShapeDtypeStruct((n_pad, v_pad), jnp.float32),
                   jax.ShapeDtypeStruct((n_tiles, 1), jnp.float32)),
        compiler_params=cparams,
    )(idx_col, tgt_col, table_p)

    # Matches torch: logits are returned flattened to (B*T, C) in this branch.
    logits = logits_pad[:N, :V]
    loss = jnp.sum(loss_parts) / jnp.float32(N)   # f32 accumulate, then mean
    return logits, loss


def _ref_forward(table, idx, targets):
    """Pure-JAX reference (embedding gather + mean cross-entropy)."""
    logits = table[idx]                                        # (B, T, V)
    if targets is None:
        return logits, None
    flat = logits.reshape(-1, table.shape[0])
    lse = jax.scipy.special.logsumexp(flat, axis=-1)
    tgt = jnp.take_along_axis(flat, targets.reshape(-1, 1), axis=-1)[:, 0]
    return flat, jnp.mean(lse - tgt)


if __name__ == "__main__":
    key = jax.random.PRNGKey(0)
    k_table, k_idx, k_tgt, k_idx2, k_tgt2 = jax.random.split(key, 5)

    vocab_size = 65            # Shakespeare-char-like vocab
    B, T = 2, 8

    # nn.Embedding default init is N(0, 1).
    table = jax.random.normal(k_table, (vocab_size, vocab_size),
                              dtype=jnp.float32)
    idx = jax.random.randint(k_idx, (B, T), 0, vocab_size, dtype=jnp.int32)
    targets = jax.random.randint(k_tgt, (B, T), 0, vocab_size, dtype=jnp.int32)

    # --- Loss branch (single tile, n_pad == N) ---
    logits, loss = bigram_forward(table, idx, targets)
    logits = jax.block_until_ready(logits)
    loss = jax.block_until_ready(loss)
    ref_flat, ref_loss = _ref_forward(table, idx, targets)
    assert logits.shape == (B * T, vocab_size)
    assert jnp.allclose(logits, ref_flat, atol=1e-5), "logits mismatch"
    assert jnp.allclose(loss, ref_loss, atol=1e-5), "loss mismatch"

    # --- Logits-only branch ---
    logits_only, none_loss = bigram_forward(table, idx, None)
    jax.block_until_ready(logits_only)
    assert none_loss is None
    assert logits_only.shape == (B, T, vocab_size)
    assert jnp.allclose(logits_only, table[idx], atol=1e-5)

    # --- Multi-tile + padded-row masking path (small max_tile_n forces a
    #     4-step "parallel" grid with masked tail rows) ---
    B2, T2 = 3, 17
    idx2 = jax.random.randint(k_idx2, (B2, T2), 0, vocab_size, dtype=jnp.int32)
    tgt2 = jax.random.randint(k_tgt2, (B2, T2), 0, vocab_size, dtype=jnp.int32)
    logits2, loss2 = bigram_forward(table, idx2, tgt2, max_tile_n=16)
    logits2 = jax.block_until_ready(logits2)
    loss2 = jax.block_until_ready(loss2)
    ref_flat2, ref_loss2 = _ref_forward(table, idx2, tgt2)
    assert jnp.allclose(logits2, ref_flat2, atol=1e-5), "tiled logits mismatch"
    assert jnp.allclose(loss2, ref_loss2, atol=1e-5), "tiled loss mismatch"

    # TODO(synk): `generate` is a host-side autoregressive loop using
    # torch.multinomial sampling; it is not part of the forward hot path and
    # is intentionally not implemented as a kernel.
    print("KERNEL_OK")
</pallas_src>

<mosaic_0001>
module attributes {stable_mosaic.version = 11 : i64} {
  func.func @_bigram_loss_kernel(%arg0: i32, %arg1: memref<16x1xi32, #tpu.memory_space<vmem>>, %arg2: memref<16x1xi32, #tpu.memory_space<vmem>>, %arg3: memref<128x128xf32, #tpu.memory_space<vmem>>, %arg4: memref<16x128xf32, #tpu.memory_space<vmem>>, %arg5: memref<1x1xf32, #tpu.memory_space<smem>>) attributes {dimension_semantics = [#tpu.dimension_semantics<parallel>], iteration_bounds = array<i64: 1>, scalar_prefetch = 0 : i64, scratch_operands = 0 : i64, tpu.core_type = #tpu.core_type<tc>, window_params = [{transform_indices = @transform_0, window_bounds = array<i64: 16, 1>}, {transform_indices = @transform_1, window_bounds = array<i64: 16, 1>}, {pipeline_mode = #tpu.pipeline_mode<synchronous>, transform_indices = @transform_2, window_bounds = array<i64: 128, 128>}, {transform_indices = @transform_3, window_bounds = array<i64: 16, 128>}, {transform_indices = @transform_4, window_bounds = array<i64: 1, 1>}]} {
    %c0 = arith.constant 0 : index
    %c0_0 = arith.constant 0 : index
    %0 = vector.load %arg1[%c0, %c0_0] : memref<16x1xi32, #tpu.memory_space<vmem>>, vector<16x1xi32>
    %c0_1 = arith.constant 0 : index
    %c0_2 = arith.constant 0 : index
    %1 = vector.load %arg3[%c0_1, %c0_2] : memref<128x128xf32, #tpu.memory_space<vmem>>, vector<128x128xf32>
    %2 = tpu.iota {dimensions = array<i32: 1>} : vector<16x128xi32>
    %3 = vector.broadcast %0 : vector<16x1xi32> to vector<16x128xi32>
    %4 = arith.cmpi eq, %2, %3 : vector<16x128xi32>
    %cst = arith.constant 1.000000e+00 : f32
    %cst_3 = arith.constant 0.000000e+00 : f32
    %5 = vector.broadcast %cst : f32 to vector<16x128xf32>
    %6 = vector.broadcast %cst_3 : f32 to vector<16x128xf32>
    %7 = arith.select %4, %5, %6 : vector<16x128xi1>, vector<16x128xf32>
    %cst_4 = arith.constant dense<0.000000e+00> : vector<16x128xf32>
    %8 = tpu.matmul %7, %1, %cst_4 {dimension_numbers = #tpu.dot_dimension_numbers<[1], [0], [0], [1], [0, 0, 1, 1], [], []>, precision = #tpu.contract_precision<fp32>} : vector<16x128xf32>, vector<128x128xf32>, vector<16x128xf32> -> vector<16x128xf32>
    %c0_5 = arith.constant 0 : index
    %c0_6 = arith.constant 0 : index
    %9 = vector.load %arg4[%c0_5, %c0_6] : memref<16x128xf32, #tpu.memory_space<vmem>>, vector<16x128xf32>
    tpu.vector_store %arg4[%c0_5, %c0_6], %8 {strides = array<i32>} : memref<16x128xf32, #tpu.memory_space<vmem>>, vector<16x128xf32>,
    %c0_7 = arith.constant 0 : index
    %c0_8 = arith.constant 0 : index
    %10 = vector.load %arg2[%c0_7, %c0_8] : memref<16x1xi32, #tpu.memory_space<vmem>>, vector<16x1xi32>
    %11 = vector.broadcast %10 : vector<16x1xi32> to vector<16x128xi32>
    %12 = arith.cmpi eq, %2, %11 : vector<16x128xi32>
    %cst_9 = arith.constant 0.000000e+00 : f32
    %13 = vector.broadcast %cst_9 : f32 to vector<16x128xf32>
    %14 = arith.select %12, %8, %13 : vector<16x128xi1>, vector<16x128xf32>
    %cst_10 = arith.constant dense<0.000000e+00> : vector<16xf32>
    %15 = vector.multi_reduction <add>, %14, %cst_10 [1] : vector<16x128xf32> to vector<16xf32>
    %16 = vector.shape_cast %15 : vector<16xf32> to vector<16x1xf32>
    %cst_11 = arith.constant dense<0xFF800000> : vector<16xf32>
    %17 = vector.multi_reduction <maximumf>, %8, %cst_11 [1] : vector<16x128xf32> to vector<16xf32>
    %18 = vector.shape_cast %17 : vector<16xf32> to vector<16x1xf32>
    %19 = vector.broadcast %18 : vector<16x1xf32> to vector<16x128xf32>
    %20 = arith.subf %8, %19 : vector<16x128xf32>
    %21 = math.exp %20 : vector<16x128xf32>
    %cst_12 = arith.constant dense<0.000000e+00> : vector<16xf32>
    %22 = vector.multi_reduction <add>, %21, %cst_12 [1] : vector<16x128xf32> to vector<16xf32>
    %23 = vector.shape_cast %22 : vector<16xf32> to vector<16x1xf32>
    %24 = math.log %23 : vector<16x1xf32>
    %25 = arith.addf %18, %24 : vector<16x1xf32>
    %26 = arith.subf %25, %16 : vector<16x1xf32>
    %27 = vector.shape_cast %26 : vector<16x1xf32> to vector<1x16x1xf32>
    %cst_13 = arith.constant dense<0.000000e+00> : vector<1xf32>
    %28 = vector.multi_reduction <add>, %27, %cst_13 [1, 2] : vector<1x16x1xf32> to vector<1xf32>
    %29 = vector.shape_cast %28 : vector<1xf32> to vector<1x1x1xf32>
    %30 = vector.extract %29[0, 0, 0] : f32 from vector<1x1x1xf32>
    %c0_14 = arith.constant 0 : index
    %c0_15 = arith.constant 0 : index
    %31 = memref.load %arg5[%c0_14, %c0_15] : memref<1x1xf32, #tpu.memory_space<smem>>
    memref.store %30, %arg5[%c0_14, %c0_15] : memref<1x1xf32, #tpu.memory_space<smem>>
    return
  }
  func.func @transform_0(%arg0: i32) -> (i32, i32) {
    %c0_i32 = arith.constant 0 : i32
    %c0_i32_0 = arith.constant 0 : i32
    return %arg0, %c0_i32 : i32, i32
  }
  func.func @transform_1(%arg0: i32) -> (i32, i32) {
    %c0_i32 = arith.constant 0 : i32
    %c0_i32_0 = arith.constant 0 : i32
    return %arg0, %c0_i32 : i32, i32
  }
  func.func @transform_2(%arg0: i32) -> (i32, i32) {
    %c0_i32 = arith.constant 0 : i32
    %c0_i32_0 = arith.constant 0 : i32
    %c0_i32_1 = arith.constant 0 : i32
    return %c0_i32, %c0_i32_0 : i32, i32
  }
  func.func @transform_3(%arg0: i32) -> (i32, i32) {
    %c0_i32 = arith.constant 0 : i32
    %c0_i32_0 = arith.constant 0 : i32
    return %arg0, %c0_i32 : i32, i32
  }
  func.func @transform_4(%arg0: i32) -> (i32, i32) {
    %c0_i32 = arith.constant 0 : i32
    %c0_i32_0 = arith.constant 0 : i32
    return %arg0, %c0_i32 : i32, i32
  }
}

</mosaic_0001>

<llo_original>
// kernel: tpu_custom_call.1
$region0: #{tpu_custom_call.1}
  #allocation0 [shape = 'u32[]', space=smem, size = 0x4, offset = 0x4, fixed_abs, tag = 'smem constant byte address 0x4 - core index']
  #allocation1 [shape = 'u32[144,128]{1,0:T(1,128)}', space=vmem, size = 0x12000, scoped, tag = 'internal scratch']
  %s0 = inlined_call_operand.vmem [shape: s32[16,1], index: 0, kind: input, shape index: {}]
  %s1 = inlined_call_operand.vmem [shape: s32[16,1], index: 1, kind: input, shape index: {}]
  %s2 = inlined_call_operand.hbm [shape: f32[128,128], index: 2, kind: input, shape index: {}]
  %s3 = inlined_call_operand.hbm [shape: f32[16,128], index: 3, kind: output, shape index: {0}]
  %s4 = inlined_call_operand.hbm [shape: f32[1,1], index: 4, kind: output, shape index: {1}]
  %5 = xla_tuple %s3, %s4
  %s6 = sld [smem:[#allocation0]]
  $region34: #{tpu_custom_call.1} parent=0
    _
  %s8 = ssub.s32 1, %s6
  %s9 = scalar_select 0, %s8, %s6
  $region1: #{tpu_custom_call.1} parent=0
    #allocation2 [shape = 'u8[65536]{0}', space=vmem, size = 0x10000, scoped, tag = 'input window, operand 2, single buffered']
    #allocation3 [shape = 's32[1]{0}', space=sflag, size = 0x4, scoped, tag = 'scoped memory for tpu_custom_call.1']
    #allocation4 [shape = 's32[1]{0}', space=sflag, size = 0x4, scoped, tag = 'scoped memory for tpu_custom_call.1']
    #allocation5 [shape = 's32[1]{0}', space=sflag, size = 0x4, scoped, tag = 'scoped memory for tpu_custom_call.1']
    #allocation6 [shape = 'u8[8192]{0}', space=vmem, size = 0x2000, scoped, tag = 'output window, operand 0, single buffered']
    #allocation7 [shape = 'u8[512]{0}', space=smem, size = 0x200, scoped, tag = 'output window, operand 1, single buffered']
    %10 = vsyncpa [#allocation3], 0
    %11 = vsyncpa [#allocation4], 0
    %12 = vsyncpa [#allocation5], 0
    // Predicated region
    $region2: #{tpu_custom_call.1} parent=1 // pred_check
      _
    $region3: #{tpu_custom_call.1} parent=1 // pred_check_branch
      %14 = sbr.rel (0) target = $region5
    $region4: #{tpu_custom_call.1} parent=1 // pred_region
      _
    $region5: #{tpu_custom_call.1} parent=1 // pred_fallthru
      _
    // Predicated region
    $region6: #{tpu_custom_call.1} parent=1 // pred_check
      _
    $region7: #{tpu_custom_call.1} parent=1 // pred_check_branch
      %16 = sbr.rel (0) target = $region9
    $region8: #{tpu_custom_call.1} parent=1 // pred_region
      _
    $region9: #{tpu_custom_call.1} parent=1 // pred_fallthru
      _
    // Predicated region
    $region10: #{tpu_custom_call.1} parent=1 // pred_check
      _
    $region11: #{tpu_custom_call.1} parent=1 // pred_check_branch
      %18 = sbr.rel (0) target = $region13
    $region12: #{tpu_custom_call.1} parent=1 // pred_region
      %s20 = ssub.s32 2048, 2048
      %21 = vsyncadd [#allocation3], %s20
      %s22 = sshll.u32 [#allocation2], 4
      %s23 = int_to_ptr.vmem [resolvable:$true] %s22
      %28 = dma.hbm_to_vmem [thread:$0]  %s2, 2048, %s23, [#allocation3], 128, 128, 8
    $region13: #{tpu_custom_call.1} parent=1 // pred_fallthru
      _
    // Predicated region
    $region14: #{tpu_custom_call.1} parent=1 // pred_check
      _
    $region15: #{tpu_custom_call.1} parent=1 // pred_check_branch
      %30 = sbr.rel (0) target = $region17
    $region16: #{tpu_custom_call.1} parent=1 // pred_region
      %31 = dma.done [#allocation3], 2048
    $region17: #{tpu_custom_call.1} parent=1 // pred_fallthru
      _
    %v32 = vld [vmem:[%s0] sm:$0xff]
    %v33 = vld [vmem:[%s0 + $0x8] sm:$0xff]
    %v34 = vld [vmem:[#allocation2] sm:$0xff]
    %v35 = vld [vmem:[#allocation2 + $0x8] sm:$0xff]
    %v36 = vld [vmem:[#allocation2 + $0x10] sm:$0xff]
    %v37 = vld [vmem:[#allocation2 + $0x18] sm:$0xff]
    %v38 = vld [vmem:[#allocation2 + $0x20] sm:$0xff]
    %v39 = vld [vmem:[#allocation2 + $0x28] sm:$0xff]
    %v40 = vld [vmem:[#allocation2 + $0x30] sm:$0xff]
    %v41 = vld [vmem:[#allocation2 + $0x38] sm:$0xff]
    %v42 = vld [vmem:[#allocation2 + $0x40] sm:$0xff]
    %v43 = vld [vmem:[#allocation2 + $0x48] sm:$0xff]
    %v44 = vld [vmem:[#allocation2 + $0x50] sm:$0xff]
    %v45 = vld [vmem:[#allocation2 + $0x58] sm:$0xff]
    %v46 = vld [vmem:[#allocation2 + $0x60] sm:$0xff]
    %v47 = vld [vmem:[#allocation2 + $0x68] sm:$0xff]
    %v48 = vld [vmem:[#allocation2 + $0x70] sm:$0xff]
    %v49 = vld [vmem:[#allocation2 + $0x78] sm:$0xff]
    %v50 = vlaneseq
    %v51 = vand.u32 %v50, 127
    %52 = vset.pattern.permute.xlu0 0
    %53 = vperm.xlu0 %52, %v32
    %v54 = vpop.permute.xlu0 %53
    %55 = vset.pattern.permute.xlu0 0
    %56 = vperm.xlu0 %55, %v33
    %v57 = vpop.permute.xlu0 %56
    %vm58 = vcmp.eq.s32.totalorder %v51, %v54
    %vm59 = vcmp.eq.s32.totalorder %v51, %v57
    %v60 = vsel %vm58, 1.0, 0.0
    %v61 = vsel %vm59, 1.0, 0.0
    %62 = vmatprep.subr.mxu0 0.0
    %v63 = vand.u32 %v34, 4294901760
    %64 = vmatpush1.msra.mxu0 %v63
    %65 = vmatprep.subr.mxu0 0.0
    %v66 = vand.u32 %v35, 4294901760
    %67 = vmatpush1.msra.mxu0 %v66
    %68 = vmatprep.subr.mxu0 0.0
    %v69 = vand.u32 %v36, 4294901760
    %70 = vmatpush1.msra.mxu0 %v69
    %71 = vmatprep.subr.mxu0 0.0
    %v72 = vand.u32 %v37, 4294901760
    %73 = vmatpush1.msra.mxu0 %v72
    %74 = vmatprep.subr.mxu0 0.0
    %v75 = vand.u32 %v38, 4294901760
    %76 = vmatpush1.msra.mxu0 %v75
    %77 = vmatprep.subr.mxu0 0.0
    %v78 = vand.u32 %v39, 4294901760
    %79 = vmatpush1.msra.mxu0 %v78
    %80 = vmatprep.subr.mxu0 0.0
    %v81 = vand.u32 %v40, 4294901760
    %82 = vmatpush1.msra.mxu0 %v81
    %83 = vmatprep.subr.mxu0 0.0
    %v84 = vand.u32 %v41, 4294901760
    %85 = vmatpush1.msra.mxu0 %v84
    %86 = vmatprep.subr.mxu0 0.0
    %v87 = vand.u32 %v42, 4294901760
    %88 = vmatpush1.msra.mxu0 %v87
    %89 = vmatprep.subr.mxu0 0.0
    %v90 = vand.u32 %v43, 4294901760
    %91 = vmatpush1.msra.mxu0 %v90
    %92 = vmatprep.subr.mxu0 0.0
    %v93 = vand.u32 %v44, 4294901760
    %94 = vmatpush1.msra.mxu0 %v93
    %95 = vmatprep.subr.mxu0 0.0
    %v96 = vand.u32 %v45, 4294901760
    %97 = vmatpush1.msra.mxu0 %v96
    %98 = vmatprep.subr.mxu0 0.0
    %v99 = vand.u32 %v46, 4294901760
    %100 = vmatpush1.msra.mxu0 %v99
    %101 = vmatprep.subr.mxu0 0.0
    %v102 = vand.u32 %v47, 4294901760
    %103 = vmatpush1.msra.mxu0 %v102
    %104 = vmatprep.subr.mxu0 0.0
    %v105 = vand.u32 %v48, 4294901760
    %106 = vmatpush1.msra.mxu0 %v105
    %107 = vmatprep.subr.mxu0 0.0
    %v108 = vand.u32 %v49, 4294901760
    %109 = vmatpush1.msra.mxu0 %v108
    %110 = vmatprep.subr.mxu0 0.0
    %111 = vmatpush1.msra.mxu0 0.0
    %112 = vmatprep.subr.mxu0 0.0
    %113 = vmatpush1.msra.mxu0 0.0
    %114 = vmatprep.subr.mxu0 0.0
    %115 = vmatpush1.msra.mxu0 0.0
    %116 = vmatprep.subr.mxu0 0.0
    %117 = vmatpush1.msra.mxu0 0.0
    %118 = vmatprep.subr.mxu0 0.0
    %119 = vmatpush1.msra.mxu0 0.0
    %120 = vmatprep.subr.mxu0 0.0
    %121 = vmatpush1.msra.mxu0 0.0
    %122 = vmatprep.subr.mxu0 0.0
    %123 = vmatpush1.msra.mxu0 0.0
    %124 = vmatprep.subr.mxu0 0.0
    %125 = vmatpush1.msra.mxu0 0.0
    %126 = vmatprep.subr.mxu0 0.0
    %127 = vmatpush1.msra.mxu0 0.0
    %128 = vmatprep.subr.mxu0 0.0
    %129 = vmatpush1.msra.mxu0 0.0
    %130 = vmatprep.subr.mxu0 0.0
    %131 = vmatpush1.msra.mxu0 0.0
    %132 = vmatprep.subr.mxu0 0.0
    %133 = vmatpush1.msra.mxu0 0.0
    %134 = vmatprep.subr.mxu0 0.0
    %135 = vmatpush1.msra.mxu0 0.0
    %136 = vmatprep.subr.mxu0 0.0
    %137 = vmatpush1.msra.mxu0 0.0
    %138 = vmatprep.subr.mxu0 0.0
    %139 = vmatpush1.msra.mxu0 0.0
    %140 = vmatprep.subr.mxu0 0.0
    %141 = vmatpush1.msra.mxu0 0.0
    %142 = vmatprep.mubr.f32.mxu0 0.0
    %v143 = vsub.f32 %v60, %v60
    %v144 = vand.u32 %v143, 4294901760
    %v145 = vsub.f32 %v143, %v144
    %v146 = vand.u32 %v145, 4294901760
    %147 = vmatmul.mubr.f32.gmra.mrb[0].mxu0 %v146
    %v148 = vpop.f32.mrb[0].mxu0
    %v149 = vadd.f32 0.0, %v148
    %v150 = vpop.f32.mrb[0].mxu0
    %151 = vmatprep.mubr.f32.mxu0 0.0
    %v152 = vsub.f32 %v61, %v61
    %v153 = vand.u32 %v152, 4294901760
    %v154 = vsub.f32 %v152, %v153
    %v155 = vand.u32 %v154, 4294901760
    %156 = vmatmul.mubr.f32.gmra.mrb[0].mxu0 %v155
    %v157 = vpop.f32.mrb[0].mxu0
    %v158 = vadd.f32 0.0, %v157
    %v159 = vpop.f32.mrb[0].mxu0
    %160 = vdwg.mxu0
    %161 = vmatprep.subr.mxu0 0.0
    %v162 = vand.u32 %v34, 4294901760
    %v163 = vsub.f32 %v34, %v162
    %v164 = vand.u32 %v163, 4294901760
    %v165 = vsub.f32 %v163, %v164
    %v166 = vand.u32 %v165, 4294901760
    %167 = vmatpush1.msra.mxu0 %v166
    %168 = vmatprep.subr.mxu0 0.0
    %v169 = vand.u32 %v35, 4294901760
    %v170 = vsub.f32 %v35, %v169
    %v171 = vand.u32 %v170, 4294901760
    %v172 = vsub.f32 %v170, %v171
    %v173 = vand.u32 %v172, 4294901760
    %174 = vmatpush1.msra.mxu0 %v173
    %175 = vmatprep.subr.mxu0 0.0
    %v176 = vand.u32 %v36, 4294901760
    %v177 = vsub.f32 %v36, %v176
    %v178 = vand.u32 %v177, 4294901760
    %v179 = vsub.f32 %v177, %v178
    %v180 = vand.u32 %v179, 4294901760
    %181 = vmatpush1.msra.mxu0 %v180
    %182 = vmatprep.subr.mxu0 0.0
    %v183 = vand.u32 %v37, 4294901760
    %v184 = vsub.f32 %v37, %v183
    %v185 = vand.u32 %v184, 4294901760
    %v186 = vsub.f32 %v184, %v185
    %v187 = vand.u32 %v186, 4294901760
    %188 = vmatpush1.msra.mxu0 %v187
    %189 = vmatprep.subr.mxu0 0.0
    %v190 = vand.u32 %v38, 4294901760
    %v191 = vsub.f32 %v38, %v190
    %v192 = vand.u32 %v191, 4294901760
    %v193 = vsub.f32 %v191, %v192
    %v194 = vand.u32 %v193, 4294901760
    %195 = vmatpush1.msra.mxu0 %v194
    %196 = vmatprep.subr.mxu0 0.0
    %v197 = vand.u32 %v39, 4294901760
    %v198 = vsub.f32 %v39, %v197
    %v199 = vand.u32 %v198, 4294901760
    %v200 = vsub.f32 %v198, %v199
    %v201 = vand.u32 %v200, 4294901760
    %202 = vmatpush1.msra.mxu0 %v201
    %203 = vmatprep.subr.mxu0 0.0
    %v204 = vand.u32 %v40, 4294901760
    %v205 = vsub.f32 %v40, %v204
    %v206 = vand.u32 %v205, 4294901760
    %v207 = vsub.f32 %v205, %v206
    %v208 = vand.u32 %v207, 4294901760
    %209 = vmatpush1.msra.mxu0 %v208
    %210 = vmatprep.subr.mxu0 0.0
    %v211 = vand.u32 %v41, 4294901760
    %v212 = vsub.f32 %v41, %v211
    %v213 = vand.u32 %v212, 4294901760
    %v214 = vsub.f32 %v212, %v213
    %v215 = vand.u32 %v214, 4294901760
    %216 = vmatpush1.msra.mxu0 %v215
    %217 = vmatprep.subr.mxu0 0.0
    %v218 = vand.u32 %v42, 4294901760
    %v219 = vsub.f32 %v42, %v218
    %v220 = vand.u32 %v219, 4294901760
    %v221 = vsub.f32 %v219, %v220
    %v222 = vand.u32 %v221, 4294901760
    %223 = vmatpush1.msra.mxu0 %v222
    %224 = vmatprep.subr.mxu0 0.0
    %v225 = vand.u32 %v43, 4294901760
    %v226 = vsub.f32 %v43, %v225
    %v227 = vand.u32 %v226, 4294901760
    %v228 = vsub.f32 %v226, %v227
    %v229 = vand.u32 %v228, 4294901760
    %230 = vmatpush1.msra.mxu0 %v229
    %231 = vmatprep.subr.mxu0 0.0
    %v232 = vand.u32 %v44, 4294901760
    %v233 = vsub.f32 %v44, %v232
    %v234 = vand.u32 %v233, 4294901760
    %v235 = vsub.f32 %v233, %v234
    %v236 = vand.u32 %v235, 4294901760
    %237 = vmatpush1.msra.mxu0 %v236
    %238 = vmatprep.subr.mxu0 0.0
    %v239 = vand.u32 %v45, 4294901760
    %v240 = vsub.f32 %v45, %v239
    %v241 = vand.u32 %v240, 4294901760
    %v242 = vsub.f32 %v240, %v241
    %v243 = vand.u32 %v242, 4294901760
    %244 = vmatpush1.msra.mxu0 %v243
    %245 = vmatprep.subr.mxu0 0.0
    %v246 = vand.u32 %v46, 4294901760
    %v247 = vsub.f32 %v46, %v246
    %v248 = vand.u32 %v247, 4294901760
    %v249 = vsub.f32 %v247, %v248
    %v250 = vand.u32 %v249, 4294901760
    %251 = vmatpush1.msra.mxu0 %v250
    %252 = vmatprep.subr.mxu0 0.0
    %v253 = vand.u32 %v47, 4294901760
    %v254 = vsub.f32 %v47, %v253
    %v255 = vand.u32 %v254, 4294901760
    %v256 = vsub.f32 %v254, %v255
    %v257 = vand.u32 %v256, 4294901760
    %258 = vmatpush1.msra.mxu0 %v257
    %259 = vmatprep.subr.mxu0 0.0
    %v260 = vand.u32 %v48, 4294901760
    %v261 = vsub.f32 %v48, %v260
    %v262 = vand.u32 %v261, 4294901760
    %v263 = vsub.f32 %v261, %v262
    %v264 = vand.u32 %v263, 4294901760
    %265 = vmatpush1.msra.mxu0 %v264
    %266 = vmatprep.subr.mxu0 0.0
    %v267 = vand.u32 %v49, 4294901760
    %v268 = vsub.f32 %v49, %v267
    %v269 = vand.u32 %v268, 4294901760
    %v270 = vsub.f32 %v268, %v269
    %v271 = vand.u32 %v270, 4294901760
    %272 = vmatpush1.msra.mxu0 %v271
    %273 = vmatprep.subr.mxu0 0.0
    %274 = vmatpush1.msra.mxu0 0.0
    %275 = vmatprep.subr.mxu0 0.0
    %276 = vmatpush1.msra.mxu0 0.0
    %277 = vmatprep.subr.mxu0 0.0
    %278 = vmatpush1.msra.mxu0 0.0
    %279 = vmatprep.subr.mxu0 0.0
    %280 = vmatpush1.msra.mxu0 0.0
    %281 = vmatprep.subr.mxu0 0.0
    %282 = vmatpush1.msra.mxu0 0.0
    %283 = vmatprep.subr.mxu0 0.0
    %284 = vmatpush1.msra.mxu0 0.0
    %285 = vmatprep.subr.mxu0 0.0
    %286 = vmatpush1.msra.mxu0 0.0
    %287 = vmatprep.subr.mxu0 0.0
    %288 = vmatpush1.msra.mxu0 0.0
    %289 = vmatprep.subr.mxu0 0.0
    %290 = vmatpush1.msra.mxu0 0.0
    %291 = vmatprep.subr.mxu0 0.0
    %292 = vmatpush1.msra.mxu0 0.0
    %293 = vmatprep.subr.mxu0 0.0
    %294 = vmatpush1.msra.mxu0 0.0
    %295 = vmatprep.subr.mxu0 0.0
    %296 = vmatpush1.msra.mxu0 0.0
    %297 = vmatprep.subr.mxu0 0.0
    %298 = vmatpush1.msra.mxu0 0.0
    %299 = vmatprep.subr.mxu0 0.0
    %300 = vmatpush1.msra.mxu0 0.0
    %301 = vmatprep.subr.mxu0 0.0
    %302 = vmatpush1.msra.mxu0 0.0
    %303 = vmatprep.subr.mxu0 0.0
    %304 = vmatpush1.msra.mxu0 0.0
    %305 = vmatprep.mubr.f32.mxu0 0.0
    %306 = vmatmul.mubr.f32.gmra.mrb[0].mxu0 %v60
    %v307 = vpop.f32.mrb[0].mxu0
    %v308 = vadd.f32 %v149, %v307
    %v309 = vpop.f32.mrb[0].mxu0
    %310 = vmatprep.mubr.f32.mxu0 0.0
    %311 = vmatmul.mubr.f32.gmra.mrb[0].mxu0 %v61
    %v312 = vpop.f32.mrb[0].mxu0
    %v313 = vadd.f32 %v158, %v312
    %v314 = vpop.f32.mrb[0].mxu0
    %315 = vdwg.mxu0
    %316 = vmatprep.subr.mxu0 0.0
    %v317 = vand.u32 %v34, 4294901760
    %v318 = vsub.f32 %v34, %v317
    %319 = vmatpush1.msra.mxu0 %v318
    %320 = vmatprep.subr.mxu0 0.0
    %v321 = vand.u32 %v35, 4294901760
    %v322 = vsub.f32 %v35, %v321
    %323 = vmatpush1.msra.mxu0 %v322
    %324 = vmatprep.subr.mxu0 0.0
    %v325 = vand.u32 %v36, 4294901760
    %v326 = vsub.f32 %v36, %v325
    %327 = vmatpush1.msra.mxu0 %v326
    %328 = vmatprep.subr.mxu0 0.0
    %v329 = vand.u32 %v37, 4294901760
    %v330 = vsub.f32 %v37, %v329
    %331 = vmatpush1.msra.mxu0 %v330
    %332 = vmatprep.subr.mxu0 0.0
    %v333 = vand.u32 %v38, 4294901760
    %v334 = vsub.f32 %v38, %v333
    %335 = vmatpush1.msra.mxu0 %v334
    %336 = vmatprep.subr.mxu0 0.0
    %v337 = vand.u32 %v39, 4294901760
    %v338 = vsub.f32 %v39, %v337
    %339 = vmatpush1.msra.mxu0 %v338
    %340 = vmatprep.subr.mxu0 0.0
    %v341 = vand.u32 %v40, 4294901760
    %v342 = vsub.f32 %v40, %v341
    %343 = vmatpush1.msra.mxu0 %v342
    %344 = vmatprep.subr.mxu0 0.0
    %v345 = vand.u32 %v41, 4294901760
    %v346 = vsub.f32 %v41, %v345
    %347 = vmatpush1.msra.mxu0 %v346
    %348 = vmatprep.subr.mxu0 0.0
    %v349 = vand.u32 %v42, 4294901760
    %v350 = vsub.f32 %v42, %v349
    %351 = vmatpush1.msra.mxu0 %v350
    %352 = vmatprep.subr.mxu0 0.0
    %v353 = vand.u32 %v43, 4294901760
    %v354 = vsub.f32 %v43, %v353
    %355 = vmatpush1.msra.mxu0 %v354
    %356 = vmatprep.subr.mxu0 0.0
    %v357 = vand.u32 %v44, 4294901760
    %v358 = vsub.f32 %v44, %v357
    %359 = vmatpush1.msra.mxu0 %v358
    %360 = vmatprep.subr.mxu0 0.0
    %v361 = vand.u32 %v45, 4294901760
    %v362 = vsub.f32 %v45, %v361
    %363 = vmatpush1.msra.mxu0 %v362
    %364 = vmatprep.subr.mxu0 0.0
    %v365 = vand.u32 %v46, 4294901760
    %v366 = vsub.f32 %v46, %v365
    %367 = vmatpush1.msra.mxu0 %v366
    %368 = vmatprep.subr.mxu0 0.0
    %v369 = vand.u32 %v47, 4294901760
    %v370 = vsub.f32 %v47, %v369
    %371 = vmatpush1.msra.mxu0 %v370
    %372 = vmatprep.subr.mxu0 0.0
    %v373 = vand.u32 %v48, 4294901760
    %v374 = vsub.f32 %v48, %v373
    %375 = vmatpush1.msra.mxu0 %v374
    %376 = vmatprep.subr.mxu0 0.0
    %v377 = vand.u32 %v49, 4294901760
    %v378 = vsub.f32 %v49, %v377
    %379 = vmatpush1.msra.mxu0 %v378
    %380 = vmatprep.subr.mxu0 0.0
    %381 = vmatpush1.msra.mxu0 0.0
    %382 = vmatprep.subr.mxu0 0.0
    %383 = vmatpush1.msra.mxu0 0.0
    %384 = vmatprep.subr.mxu0 0.0
    %385 = vmatpush1.msra.mxu0 0.0
    %386 = vmatprep.subr.mxu0 0.0
    %387 = vmatpush1.msra.mxu0 0.0
    %388 = vmatprep.subr.mxu0 0.0
    %389 = vmatpush1.msra.mxu0 0.0
    %390 = vmatprep.subr.mxu0 0.0
    %391 = vmatpush1.msra.mxu0 0.0
    %392 = vmatprep.subr.mxu0 0.0
    %393 = vmatpush1.msra.mxu0 0.0
    %394 = vmatprep.subr.mxu0 0.0
    %395 = vmatpush1.msra.mxu0 0.0
    %396 = vmatprep.subr.mxu0 0.0
    %397 = vmatpush1.msra.mxu0 0.0
    %398 = vmatprep.subr.mxu0 0.0
    %399 = vmatpush1.msra.mxu0 0.0
    %400 = vmatprep.subr.mxu0 0.0
    %401 = vmatpush1.msra.mxu0 0.0
    %402 = vmatprep.subr.mxu0 0.0
    %403 = vmatpush1.msra.mxu0 0.0
    %404 = vmatprep.subr.mxu0 0.0
    %405 = vmatpush1.msra.mxu0 0.0
    %406 = vmatprep.subr.mxu0 0.0
    %407 = vmatpush1.msra.mxu0 0.0
    %408 = vmatprep.subr.mxu0 0.0
    %409 = vmatpush1.msra.mxu0 0.0
    %410 = vmatprep.subr.mxu0 0.0
    %411 = vmatpush1.msra.mxu0 0.0
    %412 = vmatprep.mubr.f32.mxu0 0.0
    %v413 = vsub.f32 %v60, %v60
    %414 = vmatmul.mubr.f32.gmra.mrb[0].mxu0 %v413
    %v415 = vpop.f32.mrb[0].mxu0
    %v416 = vadd.f32 %v308, %v415
    %v417 = vpop.f32.mrb[0].mxu0
    %418 = vmatprep.mubr.f32.mxu0 0.0
    %v419 = vsub.f32 %v61, %v61
    %420 = vmatmul.mubr.f32.gmra.mrb[0].mxu0 %v419
    %v421 = vpop.f32.mrb[0].mxu0
    %v422 = vadd.f32 %v313, %v421
    %v423 = vpop.f32.mrb[0].mxu0
    %424 = vdwg.mxu0
    %425 = vmatprep.subr.mxu0 0.0
    %v426 = vand.u32 %v34, 4294901760
    %427 = vmatpush1.msra.mxu0 %v426
    %428 = vmatprep.subr.mxu0 0.0
    %v429 = vand.u32 %v35, 4294901760
    %430 = vmatpush1.msra.mxu0 %v429
    %431 = vmatprep.subr.mxu0 0.0
    %v432 = vand.u32 %v36, 4294901760
    %433 = vmatpush1.msra.mxu0 %v432
    %434 = vmatprep.subr.mxu0 0.0
    %v435 = vand.u32 %v37, 4294901760
    %436 = vmatpush1.msra.mxu0 %v435
    %437 = vmatprep.subr.mxu0 0.0
    %v438 = vand.u32 %v38, 4294901760
    %439 = vmatpush1.msra.mxu0 %v438
    %440 = vmatprep.subr.mxu0 0.0
    %v441 = vand.u32 %v39, 4294901760
    %442 = vmatpush1.msra.mxu0 %v441
    %443 = vmatprep.subr.mxu0 0.0
    %v444 = vand.u32 %v40, 4294901760
    %445 = vmatpush1.msra.mxu0 %v444
    %446 = vmatprep.subr.mxu0 0.0
    %v447 = vand.u32 %v41, 4294901760
    %448 = vmatpush1.msra.mxu0 %v447
    %449 = vmatprep.subr.mxu0 0.0
    %v450 = vand.u32 %v42, 4294901760
    %451 = vmatpush1.msra.mxu0 %v450
    %452 = vmatprep.subr.mxu0 0.0
    %v453 = vand.u32 %v43, 4294901760
    %454 = vmatpush1.msra.mxu0 %v453
    %455 = vmatprep.subr.mxu0 0.0
    %v456 = vand.u32 %v44, 4294901760
    %457 = vmatpush1.msra.mxu0 %v456
    %458 = vmatprep.subr.mxu0 0.0
    %v459 = vand.u32 %v45, 4294901760
    %460 = vmatpush1.msra.mxu0 %v459
    %461 = vmatprep.subr.mxu0 0.0
    %v462 = vand.u32 %v46, 4294901760
    %463 = vmatpush1.msra.mxu0 %v462
    %464 = vmatprep.subr.mxu0 0.0
    %v465 = vand.u32 %v47, 4294901760
    %466 = vmatpush1.msra.mxu0 %v465
    %467 = vmatprep.subr.mxu0 0.0
    %v468 = vand.u32 %v48, 4294901760
    %469 = vmatpush1.msra.mxu0 %v468
    %470 = vmatprep.subr.mxu0 0.0
    %v471 = vand.u32 %v49, 4294901760
    %472 = vmatpush1.msra.mxu0 %v471
    %473 = vmatprep.subr.mxu0 0.0
    %474 = vmatpush1.msra.mxu0 0.0
    %475 = vmatprep.subr.mxu0 0.0
    %476 = vmatpush1.msra.mxu0 0.0
    %477 = vmatprep.subr.mxu0 0.0
    %478 = vmatpush1.msra.mxu0 0.0
    %479 = vmatprep.subr.mxu0 0.0
    %480 = vmatpush1.msra.mxu0 0.0
    %481 = vmatprep.subr.mxu0 0.0
    %482 = vmatpush1.msra.mxu0 0.0
    %483 = vmatprep.subr.mxu0 0.0
    %484 = vmatpush1.msra.mxu0 0.0
    %485 = vmatprep.subr.mxu0 0.0
    %486 = vmatpush1.msra.mxu0 0.0
    %487 = vmatprep.subr.mxu0 0.0
    %488 = vmatpush1.msra.mxu0 0.0
    %489 = vmatprep.subr.mxu0 0.0
    %490 = vmatpush1.msra.mxu0 0.0
    %491 = vmatprep.subr.mxu0 0.0
    %492 = vmatpush1.msra.mxu0 0.0
    %493 = vmatprep.subr.mxu0 0.0
    %494 = vmatpush1.msra.mxu0 0.0
    %495 = vmatprep.subr.mxu0 0.0
    %496 = vmatpush1.msra.mxu0 0.0
    %497 = vmatprep.subr.mxu0 0.0
    %498 = vmatpush1.msra.mxu0 0.0
    %499 = vmatprep.subr.mxu0 0.0
    %500 = vmatpush1.msra.mxu0 0.0
    %501 = vmatprep.subr.mxu0 0.0
    %502 = vmatpush1.msra.mxu0 0.0
    %503 = vmatprep.subr.mxu0 0.0
    %504 = vmatpush1.msra.mxu0 0.0
    %505 = vmatprep.mubr.f32.mxu0 0.0
    %v506 = vsub.f32 %v60, %v60
    %v507 = vand.u32 %v506, 4294901760
    %508 = vmatmul.mubr.f32.gmra.mrb[0].mxu0 %v507
    %v509 = vpop.f32.mrb[0].mxu0
    %v510 = vadd.f32 %v416, %v509
    %v511 = vpop.f32.mrb[0].mxu0
    %512 = vmatprep.mubr.f32.mxu0 0.0
    %v513 = vsub.f32 %v61, %v61
    %v514 = vand.u32 %v513, 4294901760
    %515 = vmatmul.mubr.f32.gmra.mrb[0].mxu0 %v514
    %v516 = vpop.f32.mrb[0].mxu0
    %v517 = vadd.f32 %v422, %v516
    %v518 = vpop.f32.mrb[0].mxu0
    %519 = vdwg.mxu0
    %520 = vmatprep.subr.mxu0 0.0
    %v521 = vand.u32 %v34, 4294901760
    %v522 = vsub.f32 %v34, %v521
    %v523 = vand.u32 %v522, 4294901760
    %524 = vmatpush1.msra.mxu0 %v523
    %525 = vmatprep.subr.mxu0 0.0
    %v526 = vand.u32 %v35, 4294901760
    %v527 = vsub.f32 %v35, %v526
    %v528 = vand.u32 %v527, 4294901760
    %529 = vmatpush1.msra.mxu0 %v528
    %530 = vmatprep.subr.mxu0 0.0
    %v531 = vand.u32 %v36, 4294901760
    %v532 = vsub.f32 %v36, %v531
    %v533 = vand.u32 %v532, 4294901760
    %534 = vmatpush1.msra.mxu0 %v533
    %535 = vmatprep.subr.mxu0 0.0
    %v536 = vand.u32 %v37, 4294901760
    %v537 = vsub.f32 %v37, %v536
    %v538 = vand.u32 %v537, 4294901760
    %539 = vmatpush1.msra.mxu0 %v538
    %540 = vmatprep.subr.mxu0 0.0
    %v541 = vand.u32 %v38, 4294901760
    %v542 = vsub.f32 %v38, %v541
    %v543 = vand.u32 %v542, 4294901760
    %544 = vmatpush1.msra.mxu0 %v543
    %545 = vmatprep.subr.mxu0 0.0
    %v546 = vand.u32 %v39, 4294901760
    %v547 = vsub.f32 %v39, %v546
    %v548 = vand.u32 %v547, 4294901760
    %549 = vmatpush1.msra.mxu0 %v548
    %550 = vmatprep.subr.mxu0 0.0
    %v551 = vand.u32 %v40, 4294901760
    %v552 = vsub.f32 %v40, %v551
    %v553 = vand.u32 %v552, 4294901760
    %554 = vmatpush1.msra.mxu0 %v553
    %555 = vmatprep.subr.mxu0 0.0
    %v556 = vand.u32 %v41, 4294901760
    %v557 = vsub.f32 %v41, %v556
    %v558 = vand.u32 %v557, 4294901760
    %559 = vmatpush1.msra.mxu0 %v558
    %560 = vmatprep.subr.mxu0 0.0
    %v561 = vand.u32 %v42, 4294901760
    %v562 = vsub.f32 %v42, %v561
    %v563 = vand.u32 %v562, 4294901760
    %564 = vmatpush1.msra.mxu0 %v563
    %565 = vmatprep.subr.mxu0 0.0
    %v566 = vand.u32 %v43, 4294901760
    %v567 = vsub.f32 %v43, %v566
    %v568 = vand.u32 %v567, 4294901760
    %569 = vmatpush1.msra.mxu0 %v568
    %570 = vmatprep.subr.mxu0 0.0
    %v571 = vand.u32 %v44, 4294901760
    %v572 = vsub.f32 %v44, %v571
    %v573 = vand.u32 %v572, 4294901760
    %574 = vmatpush1.msra.mxu0 %v573
    %575 = vmatprep.subr.mxu0 0.0
    %v576 = vand.u32 %v45, 4294901760
    %v577 = vsub.f32 %v45, %v576
    %v578 = vand.u32 %v577, 4294901760
    %579 = vmatpush1.msra.mxu0 %v578
    %580 = vmatprep.subr.mxu0 0.0
    %v581 = vand.u32 %v46, 4294901760
    %v582 = vsub.f32 %v46, %v581
    %v583 = vand.u32 %v582, 4294901760
    %584 = vmatpush1.msra.mxu0 %v583
    %585 = vmatprep.subr.mxu0 0.0
    %v586 = vand.u32 %v47, 4294901760
    %v587 = vsub.f32 %v47, %v586
    %v588 = vand.u32 %v587, 4294901760
    %589 = vmatpush1.msra.mxu0 %v588
    %590 = vmatprep.subr.mxu0 0.0
    %v591 = vand.u32 %v48, 4294901760
    %v592 = vsub.f32 %v48, %v591
    %v593 = vand.u32 %v592, 4294901760
    %594 = vmatpush1.msra.mxu0 %v593
    %595 = vmatprep.subr.mxu0 0.0
    %v596 = vand.u32 %v49, 4294901760
    %v597 = vsub.f32 %v49, %v596
    %v598 = vand.u32 %v597, 4294901760
    %599 = vmatpush1.msra.mxu0 %v598
    %600 = vmatprep.subr.mxu0 0.0
    %601 = vmatpush1.msra.mxu0 0.0
    %602 = vmatprep.subr.mxu0 0.0
    %603 = vmatpush1.msra.mxu0 0.0
    %604 = vmatprep.subr.mxu0 0.0
    %605 = vmatpush1.msra.mxu0 0.0
    %606 = vmatprep.subr.mxu0 0.0
    %607 = vmatpush1.msra.mxu0 0.0
    %608 = vmatprep.subr.mxu0 0.0
    %609 = vmatpush1.msra.mxu0 0.0
    %610 = vmatprep.subr.mxu0 0.0
    %611 = vmatpush1.msra.mxu0 0.0
    %612 = vmatprep.subr.mxu0 0.0
    %613 = vmatpush1.msra.mxu0 0.0
    %614 = vmatprep.subr.mxu0 0.0
    %615 = vmatpush1.msra.mxu0 0.0
    %616 = vmatprep.subr.mxu0 0.0
    %617 = vmatpush1.msra.mxu0 0.0
    %618 = vmatprep.subr.mxu0 0.0
    %619 = vmatpush1.msra.mxu0 0.0
    %620 = vmatprep.subr.mxu0 0.0
    %621 = vmatpush1.msra.mxu0 0.0
    %622 = vmatprep.subr.mxu0 0.0
    %623 = vmatpush1.msra.mxu0 0.0
    %624 = vmatprep.subr.mxu0 0.0
    %625 = vmatpush1.msra.mxu0 0.0
    %626 = vmatprep.subr.mxu0 0.0
    %627 = vmatpush1.msra.mxu0 0.0
    %628 = vmatprep.subr.mxu0 0.0
    %629 = vmatpush1.msra.mxu0 0.0
    %630 = vmatprep.subr.mxu0 0.0
    %631 = vmatpush1.msra.mxu0 0.0
    %632 = vmatprep.mubr.f32.mxu0 0.0
    %633 = vmatmul.mubr.f32.gmra.mrb[0].mxu0 %v60
    %v634 = vpop.f32.mrb[0].mxu0
    %v635 = vadd.f32 %v510, %v634
    %v636 = vpop.f32.mrb[0].mxu0
    %637 = vmatprep.mubr.f32.mxu0 0.0
    %638 = vmatmul.mubr.f32.gmra.mrb[0].mxu0 %v61
    %v639 = vpop.f32.mrb[0].mxu0
    %v640 = vadd.f32 %v517, %v639
    %v641 = vpop.f32.mrb[0].mxu0
    %642 = vdwg.mxu0
    %643 = vmatprep.subr.mxu0 0.0
    %v644 = vand.u32 %v34, 4294901760
    %645 = vmatpush1.msra.mxu0 %v644
    %646 = vmatprep.subr.mxu0 0.0
    %v647 = vand.u32 %v35, 4294901760
    %648 = vmatpush1.msra.mxu0 %v647
    %649 = vmatprep.subr.mxu0 0.0
    %v650 = vand.u32 %v36, 4294901760
    %651 = vmatpush1.msra.mxu0 %v650
    %652 = vmatprep.subr.mxu0 0.0
    %v653 = vand.u32 %v37, 4294901760
    %654 = vmatpush1.msra.mxu0 %v653
    %655 = vmatprep.subr.mxu0 0.0
    %v656 = vand.u32 %v38, 4294901760
    %657 = vmatpush1.msra.mxu0 %v656
    %658 = vmatprep.subr.mxu0 0.0
    %v659 = vand.u32 %v39, 4294901760
    %660 = vmatpush1.msra.mxu0 %v659
    %661 = vmatprep.subr.mxu0 0.0
    %v662 = vand.u32 %v40, 4294901760
    %663 = vmatpush1.msra.mxu0 %v662
    %664 = vmatprep.subr.mxu0 0.0
    %v665 = vand.u32 %v41, 4294901760
    %666 = vmatpush1.msra.mxu0 %v665
    %667 = vmatprep.subr.mxu0 0.0
    %v668 = vand.u32 %v42, 4294901760
    %669 = vmatpush1.msra.mxu0 %v668
    %670 = vmatprep.subr.mxu0 0.0
    %v671 = vand.u32 %v43, 4294901760
    %672 = vmatpush1.msra.mxu0 %v671
    %673 = vmatprep.subr.mxu0 0.0
    %v674 = vand.u32 %v44, 4294901760
    %675 = vmatpush1.msra.mxu0 %v674
    %676 = vmatprep.subr.mxu0 0.0
    %v677 = vand.u32 %v45, 4294901760
    %678 = vmatpush1.msra.mxu0 %v677
    %679 = vmatprep.subr.mxu0 0.0
    %v680 = vand.u32 %v46, 4294901760
    %681 = vmatpush1.msra.mxu0 %v680
    %682 = vmatprep.subr.mxu0 0.0
    %v683 = vand.u32 %v47, 4294901760
    %684 = vmatpush1.msra.mxu0 %v683
    %685 = vmatprep.subr.mxu0 0.0
    %v686 = vand.u32 %v48, 4294901760
    %687 = vmatpush1.msra.mxu0 %v686
    %688 = vmatprep.subr.mxu0 0.0
    %v689 = vand.u32 %v49, 4294901760
    %690 = vmatpush1.msra.mxu0 %v689
    %691 = vmatprep.subr.mxu0 0.0
    %692 = vmatpush1.msra.mxu0 0.0
    %693 = vmatprep.subr.mxu0 0.0
    %694 = vmatpush1.msra.mxu0 0.0
    %695 = vmatprep.subr.mxu0 0.0
    %696 = vmatpush1.msra.mxu0 0.0
    %697 = vmatprep.subr.mxu0 0.0
    %698 = vmatpush1.msra.mxu0 0.0
    %699 = vmatprep.subr.mxu0 0.0
    %700 = vmatpush1.msra.mxu0 0.0
    %701 = vmatprep.subr.mxu0 0.0
    %702 = vmatpush1.msra.mxu0 0.0
    %703 = vmatprep.subr.mxu0 0.0
    %704 = vmatpush1.msra.mxu0 0.0
    %705 = vmatprep.subr.mxu0 0.0
    %706 = vmatpush1.msra.mxu0 0.0
    %707 = vmatprep.subr.mxu0 0.0
    %708 = vmatpush1.msra.mxu0 0.0
    %709 = vmatprep.subr.mxu0 0.0
    %710 = vmatpush1.msra.mxu0 0.0
    %711 = vmatprep.subr.mxu0 0.0
    %712 = vmatpush1.msra.mxu0 0.0
    %713 = vmatprep.subr.mxu0 0.0
    %714 = vmatpush1.msra.mxu0 0.0
    %715 = vmatprep.subr.mxu0 0.0
    %716 = vmatpush1.msra.mxu0 0.0
    %717 = vmatprep.subr.mxu0 0.0
    %718 = vmatpush1.msra.mxu0 0.0
    %719 = vmatprep.subr.mxu0 0.0
    %720 = vmatpush1.msra.mxu0 0.0
    %721 = vmatprep.subr.mxu0 0.0
    %722 = vmatpush1.msra.mxu0 0.0
    %723 = vmatprep.mubr.f32.mxu0 0.0
    %724 = vmatmul.mubr.f32.gmra.mrb[0].mxu0 %v60
    %v725 = vpop.f32.mrb[0].mxu0
    %v726 = vadd.f32 %v635, %v725
    %v727 = vpop.f32.mrb[0].mxu0
    %728 = vmatprep.mubr.f32.mxu0 0.0
    %729 = vmatmul.mubr.f32.gmra.mrb[0].mxu0 %v61
    %v730 = vpop.f32.mrb[0].mxu0
    %v731 = vadd.f32 %v640, %v730
    %v732 = vpop.f32.mrb[0].mxu0
    %733 = vdwg.mxu0
    %734 = vst [vmem:[#allocation6] sm:$0xff] %v726
    %735 = vst [vmem:[#allocation6 + $0x8] sm:$0xff] %v731
    %v736 = vld [vmem:[%s1] sm:$0xff]
    %v737 = vld [vmem:[%s1 + $0x8] sm:$0xff]
    %738 = vset.pattern.permute.xlu0 0
    %739 = vperm.xlu0 %738, %v736
    %v740 = vpop.permute.xlu0 %739
    %741 = vset.pattern.permute.xlu0 0
    %742 = vperm.xlu0 %741, %v737
    %v743 = vpop.permute.xlu0 %742
    %vm744 = vcmp.eq.s32.totalorder %v51, %v740
    %vm745 = vcmp.eq.s32.totalorder %v51, %v743
    %v746 = vsel %vm744, %v726, 0.0
    %v747 = vsel %vm745, %v731, 0.0
    %748 = vadd.xlane.f32.xlu0 %v746
    %v749 = vpop.xlane.xlu0 %748
    %750 = vadd.xlane.f32.xlu0 %v747
    %v751 = vpop.xlane.xlu0 %750
    %752 = vmax.xlane.f32.xlu0 %v726
    %v753 = vpop.xlane.xlu0 %752
    %754 = vmax.xlane.f32.xlu0 %v731
    %v755 = vpop.xlane.xlu0 %754
    %v756 = vsub.f32 %v726, %v753
    %v757 = vsub.f32 %v731, %v755
    %v758 = vmul.f32 %v756, 1.442695
    %v759 = vpow.pop %v758
    %v760 = vmul.f32 %v757, 1.442695
    %v761 = vpow.pop %v760
    %762 = vadd.xlane.f32.xlu0 %v759
    %v763 = vpop.xlane.xlu0 %762
    %764 = vadd.xlane.f32.xlu0 %v761
    %v765 = vpop.xlane.xlu0 %764
    %v766 = vlog2.pop %v763
    %v767 = vmul.f32 %v766, 0.6931472
    %v768 = vlog2.pop %v765
    %v769 = vmul.f32 %v768, 0.6931472
    %v770 = vadd.f32 %v753, %v767
    %v771 = vadd.f32 %v755, %v769
    %v772 = vsub.f32 %v770, %v749
    %v773 = vsub.f32 %v771, %v751
    %vm774 = vcmask 7168
    %v775 = vsel %vm774, %v772, 0.0
    %v776 = vsel %vm774, %v773, 0.0
    %v777 = vadd.f32 %v775, %v776
    %778 = vadd.xlane.f32.xlu0 %v777
    %v779 = vpop.xlane.xlu0 %778
    %v780 = vrot.slane %v779, 4
    %v781 = vadd.f32 %v779, %v780
    %v782 = vrot.slane %v781, 2
    %v783 = vadd.f32 %v781, %v782
    %v784 = vrot.slane %v783, 1
    %v785 = vadd.f32 %v783, %v784
    %s786 = vtos %v785
    %s787 = scalar_lea.smem [#allocation7], 0
    %788 = sst [smem:[%s787]] %s786
    // Predicated region
    $region18: #{tpu_custom_call.1} parent=1 // pred_check
      _
    $region19: #{tpu_custom_call.1} parent=1 // pred_check_branch
      %790 = sbr.rel (0) target = $region21
    $region20: #{tpu_custom_call.1} parent=1 // pred_region
      %s792 = ssub.s32 256, 256
      %793 = vsyncadd [#allocation4], %s792
      %s794 = sshll.u32 [#allocation6], 4
      %s795 = int_to_ptr.vmem [resolvable:$true] %s794
      %800 = dma.vmem_to_hbm [thread:$0]  %s795, 256, %s3, [#allocation4], 128, 128, 8
    $region21: #{tpu_custom_call.1} parent=1 // pred_fallthru
      _
    // Predicated region
    $region22: #{tpu_custom_call.1} parent=1 // pred_check
      _
    $region23: #{tpu_custom_call.1} parent=1 // pred_check_branch
      %802 = sbr.rel (0) target = $region25
    $region24: #{tpu_custom_call.1} parent=1 // pred_region
      %s804 = ssub.s32 16, 16
      %805 = vsyncadd [#allocation5], %s804
      %808 = dma.smem_to_hbm [#allocation7], 16, %s4, [#allocation5]
    $region25: #{tpu_custom_call.1} parent=1 // pred_fallthru
      _
    // Predicated region
    $region26: #{tpu_custom_call.1} parent=1 // pred_check
      _
    $region27: #{tpu_custom_call.1} parent=1 // pred_check_branch
      %810 = sbr.rel (0) target = $region29
    $region28: #{tpu_custom_call.1} parent=1 // pred_region
      %811 = dma.done [#allocation4], 256
    $region29: #{tpu_custom_call.1} parent=1 // pred_fallthru
      _
    // Predicated region
    $region30: #{tpu_custom_call.1} parent=1 // pred_check
      _
    $region31: #{tpu_custom_call.1} parent=1 // pred_check_branch
      %813 = sbr.rel (0) target = $region33
    $region32: #{tpu_custom_call.1} parent=1 // pred_region
      %814 = dma.done [#allocation5], 16
    $region33: #{tpu_custom_call.1} parent=1 // pred_fallthru
      _
    %815 = sfence
    %816 = vsyncpa [#allocation3], 1
    %817 = vsyncpa [#allocation4], 1
    %818 = vsyncpa [#allocation5], 1

</llo_original>
